<compile_context>
chip_gen: v7x
topology: tpu7x:2x2x1
jax: 0.10.0
libtpu: 0.0.40
codegen_flags: <defaults>
</compile_context>

<pallas_src>
import functools
import math

import jax
import jax.numpy as jnp
from jax.experimental import pallas as pl
from jax.experimental.pallas import tpu as pltpu


# ---------------------------------------------------------------------------
# Kernel
# ---------------------------------------------------------------------------
def _svfe_kernel(x_ref, w1_ref, b1_ref, s1_ref, t1_ref,
                 w2a_ref, w2b_ref, b2_ref, s2_ref, t2_ref, o_ref):
    """Fused VFE1 + VFE2 for one block of GB voxels.

    x_ref  : (GB, Tp, 7)   point features; Tp = sampleNum padded to a multiple
                           of 8 with edge replication (wrapper contract), so a
                           max over Tp rows equals the max over the valid rows.
    w1_ref : (7, 16)       stage-1 Linear weight (transposed vs torch).
    w2a_ref: (16, 64)      stage-2 weight rows acting on the pointwise half.
    w2b_ref: (16, 64)      stage-2 weight rows acting on the per-voxel-max half.
    b*/s*/t*_ref : (1, C)  bias / folded-BN scale / folded-BN shift.
    o_ref  : (GB, T, 128)  concat([pointwise, per-voxel max]) for valid rows.
    """
    gb, tp, cin = x_ref.shape
    tv = o_ref.shape[1]                       # number of valid sampleNum rows
    c1 = w1_ref.shape[1]
    c2 = w2a_ref.shape[1]

    # ---- stage 1: Linear(7->16) -> ReLU -> BN affine (eval) ----------------
    x = x_ref[...].reshape(gb * tp, cin)      # tile-aligned collapse (Tp % 8 == 0)
    h1 = jnp.dot(x, w1_ref[...], preferred_element_type=jnp.float32)
    h1 = jnp.maximum(h1 + b1_ref[...], 0.0) * s1_ref[...] + t1_ref[...]
    m1 = jnp.max(h1.reshape(gb, tp, c1), axis=1)          # (gb, c1) per-voxel max

    # ---- stage 2: Linear(32->64) -> ReLU -> BN affine (eval) ---------------
    # concat([h1, broadcast(m1)]) @ W2  ==  h1 @ W2[:16] + broadcast(m1 @ W2[16:])
    h2p = jnp.dot(h1, w2a_ref[...], preferred_element_type=jnp.float32)   # (gb*tp, c2)
    h2v = jnp.dot(m1, w2b_ref[...], preferred_element_type=jnp.float32)   # (gb, c2)
    h2 = h2p.reshape(gb, tp, c2) + h2v.reshape(gb, 1, c2) + b2_ref[...]
    h2 = jnp.maximum(h2, 0.0) * s2_ref[...] + t2_ref[...]
    m2 = jnp.max(h2, axis=1, keepdims=True)                               # (gb, 1, c2)

    # Single lane-dense 128-wide store; drop the replicated pad rows.
    # TODO(synk): if the downstream consumer permitted it, emitting the
    # pointwise (G,T,64) and per-voxel max (G,1,64) as two outputs (or bf16)
    # would cut the HBM writeback ~2x; kept as the concatenated f32 tensor to
    # preserve the module's output contract.
    o_ref[...] = jnp.concatenate(
        [h2[:, :tv, :], jnp.broadcast_to(m2, (gb, tv, c2))], axis=-1)


# ---------------------------------------------------------------------------
# pallas_call wrapper
# ---------------------------------------------------------------------------
def _svfe_call(x_pad, params2, *, t_valid, gb, vmem_limit, cost_estimate):
    """x_pad: (G, Tp, Cin) edge-padded points -> (G, t_valid, 128)."""
    G, Tp, Cin = x_pad.shape
    w1, b1, s1, t1 = params2["vfe1"]
    w2a, w2b, b2, s2, t2 = params2["vfe2"]
    cout = 2 * w2a.shape[1]
    const = lambda g: (0, 0)

    return pl.pallas_call(
        _svfe_kernel,
        out_shape=jax.ShapeDtypeStruct((G, t_valid, cout), jnp.float32),
        grid_spec=pltpu.PrefetchScalarGridSpec(
            num_scalar_prefetch=0,
            grid=(pl.cdiv(G, gb),),
            in_specs=[
                pl.BlockSpec((gb, Tp, Cin), lambda g: (g, 0, 0)),
                pl.BlockSpec(w1.shape, const),
                pl.BlockSpec(b1.shape, const),
                pl.BlockSpec(s1.shape, const),
                pl.BlockSpec(t1.shape, const),
                pl.BlockSpec(w2a.shape, const),
                pl.BlockSpec(w2b.shape, const),
                pl.BlockSpec(b2.shape, const),
                pl.BlockSpec(s2.shape, const),
                pl.BlockSpec(t2.shape, const),
            ],
            out_specs=pl.BlockSpec((gb, t_valid, cout), lambda g: (g, 0, 0)),
        ),
        compiler_params=pltpu.CompilerParams(
            dimension_semantics=("parallel",),
            vmem_limit_bytes=vmem_limit,
        ),
        cost_estimate=cost_estimate,
    )(x_pad, w1, b1, s1, t1, w2a, w2b, b2, s2, t2)


# ---------------------------------------------------------------------------
# Per-chip tuning (block size / VMEM limit)
# ---------------------------------------------------------------------------
@functools.lru_cache(maxsize=None)
def _vmem_capacity_bytes():
    """Physical VMEM of the local TPU; conservative fallback if unknown."""
    try:
        return int(pltpu.get_tpu_info().vmem_capacity_bytes)
    except Exception:
        return 64 * 1024 * 1024          # assume the smallest (v7x-like) budget


def _tuning(G):
    """Pick (voxels-per-grid-step, vmem_limit_bytes) for the local chip.

    The kernel is HBM-writeback bound, so the goal is simply the largest block
    that fits VMEM (amortizing the ~0.35us/step pipeline overhead against the
    output DMA) while keeping >=2 parallel grid steps so both v7x TensorCores
    receive work (free on single-TC v5e/v6e).
    """
    cap = _vmem_capacity_bytes()
    if cap >= 100 * 1024 * 1024:         # v5e / v6e: 128 MiB physical VMEM
        gb, vmem_limit = 256, 96 * 1024 * 1024
    else:                                # v7x (64 MiB) or unknown: stay safe
        gb, vmem_limit = 128, min(48 * 1024 * 1024, (cap * 3) // 4)
    if G > 1:
        gb = min(gb, (G + 1) // 2)       # ensure >= 2 grid steps
    return max(1, min(gb, G)), vmem_limit


# ---------------------------------------------------------------------------
# Forward
# ---------------------------------------------------------------------------
@functools.partial(jax.jit, static_argnames=("gb", "vmem_limit"))
def _svfe_jit(x, params, *, gb, vmem_limit):
    B, V, T, Cin = x.shape
    G = B * V
    Tp = ((T + 7) // 8) * 8              # pad points axis: (G,T)->(G*T) tile-aligned
    c1 = params["vfe1"][0].shape[1]
    c2 = params["vfe2"][0].shape[1]

    x2 = x.reshape(G, T, Cin)
    if Tp != T:
        # Edge-replicate the last point: the in-kernel max over Tp rows is then
        # identical to the max over the T valid rows (no masking required).
        x2 = jnp.pad(x2, ((0, 0), (0, Tp - T), (0, 0)), mode="edge")

    # Split the stage-2 weight once here (not per grid step); see kernel notes.
    w1, b1, s1, t1 = params["vfe1"]
    w2, b2, s2, t2 = params["vfe2"]
    params2 = {"vfe1": (w1, b1, s1, t1),
               "vfe2": (w2[:c1], w2[c1:], b2, s2, t2)}
    # NOTE: folding the BN scale into the Linear weights is intentionally
    # skipped: it only removes one non-binding VPU multiply and is valid
    # per-channel only for positive folded scale.

    flops = 2 * G * Tp * (Cin * c1 + 2 * c1 * c2)
    param_bytes = sum(int(p.size) * 4 for pr in params2.values() for p in pr)
    bytes_accessed = int(x2.size) * 4 + G * T * 2 * c2 * 4 + param_bytes
    ce = pl.CostEstimate(flops=flops, transcendentals=0,
                         bytes_accessed=bytes_accessed)

    y = _svfe_call(x2, params2, t_valid=T, gb=gb, vmem_limit=vmem_limit,
                   cost_estimate=ce)
    return y.reshape(B, V, T, 2 * c2)


def svfe_forward(x, params):
    """x: (B, V, T, 7) -> (B, V, T, 128), T = sampleNum (eval-mode BN)."""
    B, V, T, Cin = x.shape
    gb, vmem_limit = _tuning(B * V)
    return _svfe_jit(x, params, gb=gb, vmem_limit=vmem_limit)


# ---------------------------------------------------------------------------
# Parameters & pure-JAX reference
# ---------------------------------------------------------------------------
def _init_fcn_params(key, cin, cout, eps=1e-5):
    """Deterministic params matching FCN(cin, cout) shapes (fresh torch init)."""
    kw, kb = jax.random.split(key)
    bound = 1.0 / math.sqrt(cin)
    # torch Linear weight is (cout, cin); we keep (cin, cout) for x @ W.
    w = jax.random.uniform(kw, (cin, cout), jnp.float32, -bound, bound)
    b = jax.random.uniform(kb, (1, cout), jnp.float32, -bound, bound)
    # BatchNorm2d fresh params: gamma=1, beta=0, running_mean=0, running_var=1.
    gamma = jnp.ones((1, cout), jnp.float32)
    beta = jnp.zeros((1, cout), jnp.float32)
    running_mean = jnp.zeros((1, cout), jnp.float32)
    running_var = jnp.ones((1, cout), jnp.float32)
    scale = gamma / jnp.sqrt(running_var + eps)
    shift = beta - running_mean * scale
    return (w, b, scale, shift)


def _svfe_reference(x, params):
    """Pure-JAX reference of the PyTorch SVFE forward (eval-mode BN)."""
    def fcn(h, w, b, scale, shift):
        h = jnp.einsum("bvtc,cd->bvtd", h, w,
                       precision=jax.lax.Precision.HIGHEST)
        h = jnp.maximum(h + b[0], 0.0)      # relu(fc(x)) then BN, as in FCN
        return h * scale[0] + shift[0]

    def vfe(h, p):
        h = fcn(h, *p)
        m = jnp.max(h, axis=2, keepdims=True)
        return jnp.concatenate([h, jnp.broadcast_to(m, h.shape)], axis=-1)

    return vfe(vfe(x, params["vfe1"]), params["vfe2"])


if __name__ == "__main__":
    key = jax.random.PRNGKey(0)
    k_in, k1, k2 = jax.random.split(key, 3)

    sample_num = 35                 # SVFE default
    B, V = 2, 4                     # small batch / voxel count
    x = jax.random.normal(k_in, (B, V, sample_num, 7), jnp.float32)

    params = {
        "vfe1": _init_fcn_params(k1, 7, 16),    # VFE(7, 16, 35)
        "vfe2": _init_fcn_params(k2, 32, 64),   # VFE(32, 64, 35)
    }

    out = svfe_forward(x, params)
    out = jax.block_until_ready(out)
    assert out.shape == (B, V, sample_num, 128), out.shape

    ref = _svfe_reference(x, params)
    err = float(jnp.max(jnp.abs(out - ref)))
    assert err < 5e-2, f"max abs error vs reference: {err}"

    print("KERNEL_OK")
</pallas_src>

<mosaic_0001>
module attributes {stable_mosaic.version = 11 : i64} {
  func.func @_svfe_kernel(%arg0: i32, %arg1: memref<4x40x7xf32, #tpu.memory_space<vmem>>, %arg2: memref<7x16xf32, #tpu.memory_space<vmem>>, %arg3: memref<1x16xf32, #tpu.memory_space<vmem>>, %arg4: memref<1x16xf32, #tpu.memory_space<vmem>>, %arg5: memref<1x16xf32, #tpu.memory_space<vmem>>, %arg6: memref<16x64xf32, #tpu.memory_space<vmem>>, %arg7: memref<16x64xf32, #tpu.memory_space<vmem>>, %arg8: memref<1x64xf32, #tpu.memory_space<vmem>>, %arg9: memref<1x64xf32, #tpu.memory_space<vmem>>, %arg10: memref<1x64xf32, #tpu.memory_space<vmem>>, %arg11: memref<4x35x128xf32, #tpu.memory_space<vmem>>) attributes {dimension_semantics = [#tpu.dimension_semantics<parallel>], iteration_bounds = array<i64: 2>, scalar_prefetch = 0 : i64, scratch_operands = 0 : i64, tpu.core_type = #tpu.core_type<tc>, window_params = [{transform_indices = @transform_0, window_bounds = array<i64: 4, 40, 7>}, {pipeline_mode = #tpu.pipeline_mode<synchronous>, transform_indices = @transform_1, window_bounds = array<i64: 7, 16>}, {pipeline_mode = #tpu.pipeline_mode<synchronous>, transform_indices = @transform_2, window_bounds = array<i64: 1, 16>}, {pipeline_mode = #tpu.pipeline_mode<synchronous>, transform_indices = @transform_3, window_bounds = array<i64: 1, 16>}, {pipeline_mode = #tpu.pipeline_mode<synchronous>, transform_indices = @transform_4, window_bounds = array<i64: 1, 16>}, {pipeline_mode = #tpu.pipeline_mode<synchronous>, transform_indices = @transform_5, window_bounds = array<i64: 16, 64>}, {pipeline_mode = #tpu.pipeline_mode<synchronous>, transform_indices = @transform_6, window_bounds = array<i64: 16, 64>}, {pipeline_mode = #tpu.pipeline_mode<synchronous>, transform_indices = @transform_7, window_bounds = array<i64: 1, 64>}, {pipeline_mode = #tpu.pipeline_mode<synchronous>, transform_indices = @transform_8, window_bounds = array<i64: 1, 64>}, {pipeline_mode = #tpu.pipeline_mode<synchronous>, transform_indices = @transform_9, window_bounds = array<i64: 1, 64>}, {transform_indices = @transform_10, window_bounds = array<i64: 4, 35, 128>}]} {
    %c0 = arith.constant 0 : index
    %c0_0 = arith.constant 0 : index
    %c0_1 = arith.constant 0 : index
    %0 = vector.load %arg1[%c0, %c0_0, %c0_1] : memref<4x40x7xf32, #tpu.memory_space<vmem>>, vector<4x40x7xf32>
    %1 = vector.shape_cast %0 : vector<4x40x7xf32> to vector<160x7xf32>
    %c0_2 = arith.constant 0 : index
    %c0_3 = arith.constant 0 : index
    %2 = vector.load %arg2[%c0_2, %c0_3] : memref<7x16xf32, #tpu.memory_space<vmem>>, vector<7x16xf32>
    %cst = arith.constant dense<0.000000e+00> : vector<160x16xf32>
    %3 = tpu.matmul %1, %2, %cst {dimension_numbers = #tpu.dot_dimension_numbers<[1], [0], [0], [1], [0, 0, 1, 1], [], []>} : vector<160x7xf32>, vector<7x16xf32>, vector<160x16xf32> -> vector<160x16xf32>
    %c0_4 = arith.constant 0 : index
    %c0_5 = arith.constant 0 : index
    %4 = vector.load %arg3[%c0_4, %c0_5] : memref<1x16xf32, #tpu.memory_space<vmem>>, vector<1x16xf32>
    %5 = vector.broadcast %4 : vector<1x16xf32> to vector<160x16xf32>
    %6 = arith.addf %3, %5 : vector<160x16xf32>
    %cst_6 = arith.constant 0.000000e+00 : f32
    %7 = vector.broadcast %cst_6 : f32 to vector<160x16xf32>
    %8 = arith.maximumf %6, %7 : vector<160x16xf32>
    %c0_7 = arith.constant 0 : index
    %c0_8 = arith.constant 0 : index
    %9 = vector.load %arg4[%c0_7, %c0_8] : memref<1x16xf32, #tpu.memory_space<vmem>>, vector<1x16xf32>
    %10 = vector.broadcast %9 : vector<1x16xf32> to vector<160x16xf32>
    %11 = arith.mulf %8, %10 : vector<160x16xf32>
    %c0_9 = arith.constant 0 : index
    %c0_10 = arith.constant 0 : index
    %12 = vector.load %arg5[%c0_9, %c0_10] : memref<1x16xf32, #tpu.memory_space<vmem>>, vector<1x16xf32>
    %13 = vector.broadcast %12 : vector<1x16xf32> to vector<160x16xf32>
    %14 = arith.addf %11, %13 : vector<160x16xf32>
    %15 = vector.shape_cast %14 : vector<160x16xf32> to vector<4x40x16xf32>
    %cst_11 = arith.constant dense<0xFF800000> : vector<4x16xf32>
    %16 = vector.multi_reduction <maximumf>, %15, %cst_11 [1] : vector<4x40x16xf32> to vector<4x16xf32>
    %c0_12 = arith.constant 0 : index
    %c0_13 = arith.constant 0 : index
    %17 = vector.load %arg6[%c0_12, %c0_13] : memref<16x64xf32, #tpu.memory_space<vmem>>, vector<16x64xf32>
    %cst_14 = arith.constant dense<0.000000e+00> : vector<160x64xf32>
    %18 = tpu.matmul %14, %17, %cst_14 {dimension_numbers = #tpu.dot_dimension_numbers<[1], [0], [0], [1], [0, 0, 1, 1], [], []>} : vector<160x16xf32>, vector<16x64xf32>, vector<160x64xf32> -> vector<160x64xf32>
    %c0_15 = arith.constant 0 : index
    %c0_16 = arith.constant 0 : index
    %19 = vector.load %arg7[%c0_15, %c0_16] : memref<16x64xf32, #tpu.memory_space<vmem>>, vector<16x64xf32>
    %cst_17 = arith.constant dense<0.000000e+00> : vector<4x64xf32>
    %20 = tpu.matmul %16, %19, %cst_17 {dimension_numbers = #tpu.dot_dimension_numbers<[1], [0], [0], [1], [0, 0, 1, 1], [], []>} : vector<4x16xf32>, vector<16x64xf32>, vector<4x64xf32> -> vector<4x64xf32>
    %21 = vector.shape_cast %18 : vector<160x64xf32> to vector<4x40x64xf32>
    %22 = vector.shape_cast %20 : vector<4x64xf32> to vector<4x1x64xf32>
    %23 = vector.broadcast %22 : vector<4x1x64xf32> to vector<4x40x64xf32>
    %24 = arith.addf %21, %23 : vector<4x40x64xf32>
    %c0_18 = arith.constant 0 : index
    %c0_19 = arith.constant 0 : index
    %25 = vector.load %arg8[%c0_18, %c0_19] : memref<1x64xf32, #tpu.memory_space<vmem>>, vector<1x64xf32>
    %26 = vector.shape_cast %25 : vector<1x64xf32> to vector<1x1x64xf32>
    %27 = vector.broadcast %26 : vector<1x1x64xf32> to vector<4x40x64xf32>
    %28 = arith.addf %24, %27 : vector<4x40x64xf32>
    %cst_20 = arith.constant 0.000000e+00 : f32
    %29 = vector.broadcast %cst_20 : f32 to vector<4x40x64xf32>
    %30 = arith.maximumf %28, %29 : vector<4x40x64xf32>
    %c0_21 = arith.constant 0 : index
    %c0_22 = arith.constant 0 : index
    %31 = vector.load %arg9[%c0_21, %c0_22] : memref<1x64xf32, #tpu.memory_space<vmem>>, vector<1x64xf32>
    %32 = vector.shape_cast %31 : vector<1x64xf32> to vector<1x1x64xf32>
    %33 = vector.broadcast %32 : vector<1x1x64xf32> to vector<4x40x64xf32>
    %34 = arith.mulf %30, %33 : vector<4x40x64xf32>
    %c0_23 = arith.constant 0 : index
    %c0_24 = arith.constant 0 : index
    %35 = vector.load %arg10[%c0_23, %c0_24] : memref<1x64xf32, #tpu.memory_space<vmem>>, vector<1x64xf32>
    %36 = vector.shape_cast %35 : vector<1x64xf32> to vector<1x1x64xf32>
    %37 = vector.broadcast %36 : vector<1x1x64xf32> to vector<4x40x64xf32>
    %38 = arith.addf %34, %37 : vector<4x40x64xf32>
    %cst_25 = arith.constant dense<0xFF800000> : vector<4x64xf32>
    %39 = vector.multi_reduction <maximumf>, %38, %cst_25 [1] : vector<4x40x64xf32> to vector<4x64xf32>
    %40 = vector.shape_cast %39 : vector<4x64xf32> to vector<4x1x64xf32>
    %41 = vector.extract_strided_slice %38 {offsets = [0, 0, 0], sizes = [4, 35, 64], strides = [1, 1, 1]} : vector<4x40x64xf32> to vector<4x35x64xf32>
    %42 = vector.shape_cast %40 : vector<4x1x64xf32> to vector<4x1x64xf32>
    %43 = vector.broadcast %42 : vector<4x1x64xf32> to vector<4x35x64xf32>
    %44 = tpu.concatenate %41, %43 in 2 : vector<4x35x64xf32>, vector<4x35x64xf32> -> vector<4x35x128xf32>
    %c0_26 = arith.constant 0 : index
    %c0_27 = arith.constant 0 : index
    %c0_28 = arith.constant 0 : index
    %45 = vector.load %arg11[%c0_26, %c0_27, %c0_28] : memref<4x35x128xf32, #tpu.memory_space<vmem>>, vector<4x35x128xf32>
    tpu.vector_store %arg11[%c0_26, %c0_27, %c0_28], %44 {strides = array<i32>} : memref<4x35x128xf32, #tpu.memory_space<vmem>>, vector<4x35x128xf32>,
    return
  }
  func.func @transform_0(%arg0: i32) -> (i32, i32, i32) {
    %c0_i32 = arith.constant 0 : i32
    %c0_i32_0 = arith.constant 0 : i32
    %c0_i32_1 = arith.constant 0 : i32
    return %arg0, %c0_i32, %c0_i32_0 : i32, i32, i32
  }
  func.func @transform_1(%arg0: i32) -> (i32, i32) {
    %c0_i32 = arith.constant 0 : i32
    %c0_i32_0 = arith.constant 0 : i32
    %c0_i32_1 = arith.constant 0 : i32
    return %c0_i32, %c0_i32_0 : i32, i32
  }
  func.func @transform_2(%arg0: i32) -> (i32, i32) {
    %c0_i32 = arith.constant 0 : i32
    %c0_i32_0 = arith.constant 0 : i32
    %c0_i32_1 = arith.constant 0 : i32
    return %c0_i32, %c0_i32_0 : i32, i32
  }
  func.func @transform_3(%arg0: i32) -> (i32, i32) {
    %c0_i32 = arith.constant 0 : i32
    %c0_i32_0 = arith.constant 0 : i32
    %c0_i32_1 = arith.constant 0 : i32
    return %c0_i32, %c0_i32_0 : i32, i32
  }
  func.func @transform_4(%arg0: i32) -> (i32, i32) {
    %c0_i32 = arith.constant 0 : i32
    %c0_i32_0 = arith.constant 0 : i32
    %c0_i32_1 = arith.constant 0 : i32
    return %c0_i32, %c0_i32_0 : i32, i32
  }
  func.func @transform_5(%arg0: i32) -> (i32, i32) {
    %c0_i32 = arith.constant 0 : i32
    %c0_i32_0 = arith.constant 0 : i32
    %c0_i32_1 = arith.constant 0 : i32
    return %c0_i32, %c0_i32_0 : i32, i32
  }
  func.func @transform_6(%arg0: i32) -> (i32, i32) {
    %c0_i32 = arith.constant 0 : i32
    %c0_i32_0 = arith.constant 0 : i32
    %c0_i32_1 = arith.constant 0 : i32
    return %c0_i32, %c0_i32_0 : i32, i32
  }
  func.func @transform_7(%arg0: i32) -> (i32, i32) {
    %c0_i32 = arith.constant 0 : i32
    %c0_i32_0 = arith.constant 0 : i32
    %c0_i32_1 = arith.constant 0 : i32
    return %c0_i32, %c0_i32_0 : i32, i32
  }
  func.func @transform_8(%arg0: i32) -> (i32, i32) {
    %c0_i32 = arith.constant 0 : i32
    %c0_i32_0 = arith.constant 0 : i32
    %c0_i32_1 = arith.constant 0 : i32
    return %c0_i32, %c0_i32_0 : i32, i32
  }
  func.func @transform_9(%arg0: i32) -> (i32, i32) {
    %c0_i32 = arith.constant 0 : i32
    %c0_i32_0 = arith.constant 0 : i32
    %c0_i32_1 = arith.constant 0 : i32
    return %c0_i32, %c0_i32_0 : i32, i32
  }
  func.func @transform_10(%arg0: i32) -> (i32, i32, i32) {
    %c0_i32 = arith.constant 0 : i32
    %c0_i32_0 = arith.constant 0 : i32
    %c0_i32_1 = arith.constant 0 : i32
    return %arg0, %c0_i32, %c0_i32_0 : i32, i32, i32
  }
}

</mosaic_0001>

<llo_original>
// kernel: _svfe_jit.1
$region0: #{_svfe_jit.1}
  #allocation0 [shape = 'u32[]', space=smem, size = 0x4, offset = 0x4, fixed_abs, tag = 'smem constant byte address 0x4 - core index']
  #allocation1 [shape = 'u32[144,128]{1,0:T(1,128)}', space=vmem, size = 0x12000, scoped, tag = 'internal scratch']
  %s0 = inlined_call_operand.vmem [shape: f32[8,40,7], index: 0, kind: input, shape index: {}]
  %s1 = inlined_call_operand.vmem [shape: f32[7,16], index: 1, kind: input, shape index: {}]
  %s2 = inlined_call_operand.vmem [shape: f32[1,16], index: 2, kind: input, shape index: {}]
  %s3 = inlined_call_operand.vmem [shape: f32[1,16], index: 3, kind: input, shape index: {}]
  %s4 = inlined_call_operand.vmem [shape: f32[1,16], index: 4, kind: input, shape index: {}]
  %s5 = inlined_call_operand.vmem [shape: f32[16,64], index: 5, kind: input, shape index: {}]
  %s6 = inlined_call_operand.vmem [shape: f32[16,64], index: 6, kind: input, shape index: {}]
  %s7 = inlined_call_operand.vmem [shape: f32[1,64], index: 7, kind: input, shape index: {}]
  %s8 = inlined_call_operand.vmem [shape: f32[1,64], index: 8, kind: input, shape index: {}]
  %s9 = inlined_call_operand.vmem [shape: f32[1,64], index: 9, kind: input, shape index: {}]
  %s10 = inlined_call_operand.vmem [shape: f32[8,35,128], index: 10, kind: output, shape index: {}]
  %s11 = sld [smem:[#allocation0]]
  $region73: #{_svfe_jit.1} parent=0
    _
  %s13 = ssub.s32 1, %s11
  %s14 = scalar_select 0, %s13, %s11
  loop: start=0, step=1, limit=4
  $region2: #{_svfe_jit.1} parent=0 // loop_pre_header
    _
  $region3: #{_svfe_jit.1} parent=0 // loop_header
    %s16 = sphi 0, %s20
    %p17 = scmp.ge.s32.totalorder %s16, 4
    %s26 = sphi 0, %s28
    %s29 = sphi 0, %s26
    %s30 = sphi 0, %s29
    %s46 = sphi 0, %s30
    %s50 = sphi 0, %s50
    %s52 = sphi 0, %s50
    %s53 = sphi 0, %s52
    %s67 = sphi 0, %s53
    %s71 = sphi 0, %s71
    %s73 = sphi 0, %s71
    %s74 = sphi 0, %s73
    %s88 = sphi 0, %s74
    %s92 = sphi 0, %s92
    %s94 = sphi 0, %s92
    %s95 = sphi 0, %s94
    %s109 = sphi 0, %s95
    %s113 = sphi 0, %s113
    %s115 = sphi 0, %s113
    %s116 = sphi 0, %s115
    %s130 = sphi 0, %s116
    %s134 = sphi 0, %s134
    %s136 = sphi 0, %s134
    %s137 = sphi 0, %s136
    %s151 = sphi 0, %s137
    %s155 = sphi 0, %s155
    %s157 = sphi 0, %s155
    %s158 = sphi 0, %s157
    %s172 = sphi 0, %s158
    %s176 = sphi 0, %s176
    %s178 = sphi 0, %s176
    %s179 = sphi 0, %s178
    %s193 = sphi 0, %s179
    %s197 = sphi 0, %s197
    %s199 = sphi 0, %s197
    %s200 = sphi 0, %s199
    %s214 = sphi 0, %s200
    %s218 = sphi 0, %s218
    %s220 = sphi 0, %s218
    %s221 = sphi 0, %s220
    %s235 = sphi 0, %s221
    %s241 = sphi 0, %s243
    %s244 = sphi 0, %s241
    %s245 = sphi 0, %s244
    %s261 = sphi 0, %s245
  $region4: #{_svfe_jit.1} parent=0 // loop_header_branch
    %19 = sbr.rel (%p17) target = $region8
  $region5: #{_svfe_jit.1} parent=0 // loop_body
    %s21 = ssub.s32 %s16, 1
    %s22 = ssub.s32 %s16, 2
    %s23 = sadd.s32 %s16, 1
    %s24 = ssub.s32 %s16, %s23
    %p25 = scmp.eq.s32.totalorder %s24, 0
    %s27 = sadd.s32 %s26, 1
    %s28 = scalar_select %p25, %s26, %s27
    %p31 = pneg %p25
    %p32 = scmp.eq.s32.totalorder %s16, 1
    %p33 = por %p31, %p32
    %p34 = scmp.ne.s32.totalorder %s26, %s29
    %p35 = scmp.eq.s32.totalorder %s16, 0
    %p36 = por %p34, %p35
    %p37 = scmp.ne.s32.totalorder %s26, %s29
    %p38 = scmp.eq.s32.totalorder %s21, 1
    %p39 = por %p37, %p38
    %p40 = scmp.ne.s32.totalorder %s29, %s30
    %p41 = scmp.eq.s32.totalorder %s21, 0
    %p42 = por %p40, %p41
    %p43 = scmp.ne.s32.totalorder %s29, %s30
    %p44 = scmp.eq.s32.totalorder %s22, 1
    %p45 = por %p43, %p44
    %p47 = scmp.ne.s32.totalorder %s30, %s46
    %p48 = scmp.eq.s32.totalorder %s22, 0
    %p49 = por %p47, %p48
    %s51 = sadd.s32 %s50, 1
    %p54 = scmp.eq.s32.totalorder %s16, 1
    %p55 = scmp.ne.s32.totalorder %s50, %s52
    %p56 = scmp.eq.s32.totalorder %s16, 0
    %p57 = por %p55, %p56
    %p58 = scmp.ne.s32.totalorder %s50, %s52
    %p59 = scmp.eq.s32.totalorder %s21, 1
    %p60 = por %p58, %p59
    %p61 = scmp.ne.s32.totalorder %s52, %s53
    %p62 = scmp.eq.s32.totalorder %s21, 0
    %p63 = por %p61, %p62
    %p64 = scmp.ne.s32.totalorder %s52, %s53
    %p65 = scmp.eq.s32.totalorder %s22, 1
    %p66 = por %p64, %p65
    %p68 = scmp.ne.s32.totalorder %s53, %s67
    %p69 = scmp.eq.s32.totalorder %s22, 0
    %p70 = por %p68, %p69
    %s72 = sadd.s32 %s71, 1
    %p75 = scmp.eq.s32.totalorder %s16, 1
    %p76 = scmp.ne.s32.totalorder %s71, %s73
    %p77 = scmp.eq.s32.totalorder %s16, 0
    %p78 = por %p76, %p77
    %p79 = scmp.ne.s32.totalorder %s71, %s73
    %p80 = scmp.eq.s32.totalorder %s21, 1
    %p81 = por %p79, %p80
    %p82 = scmp.ne.s32.totalorder %s73, %s74
    %p83 = scmp.eq.s32.totalorder %s21, 0
    %p84 = por %p82, %p83
    %p85 = scmp.ne.s32.totalorder %s73, %s74
    %p86 = scmp.eq.s32.totalorder %s22, 1
    %p87 = por %p85, %p86
    %p89 = scmp.ne.s32.totalorder %s74, %s88
    %p90 = scmp.eq.s32.totalorder %s22, 0
    %p91 = por %p89, %p90
    %s93 = sadd.s32 %s92, 1
    %p96 = scmp.eq.s32.totalorder %s16, 1
    %p97 = scmp.ne.s32.totalorder %s92, %s94
    %p98 = scmp.eq.s32.totalorder %s16, 0
    %p99 = por %p97, %p98
    %p100 = scmp.ne.s32.totalorder %s92, %s94
    %p101 = scmp.eq.s32.totalorder %s21, 1
    %p102 = por %p100, %p101
    %p103 = scmp.ne.s32.totalorder %s94, %s95
    %p104 = scmp.eq.s32.totalorder %s21, 0
    %p105 = por %p103, %p104
    %p106 = scmp.ne.s32.totalorder %s94, %s95
    %p107 = scmp.eq.s32.totalorder %s22, 1
    %p108 = por %p106, %p107
    %p110 = scmp.ne.s32.totalorder %s95, %s109
    %p111 = scmp.eq.s32.totalorder %s22, 0
    %p112 = por %p110, %p111
    %s114 = sadd.s32 %s113, 1
    %p117 = scmp.eq.s32.totalorder %s16, 1
    %p118 = scmp.ne.s32.totalorder %s113, %s115
    %p119 = scmp.eq.s32.totalorder %s16, 0
    %p120 = por %p118, %p119
    %p121 = scmp.ne.s32.totalorder %s113, %s115
    %p122 = scmp.eq.s32.totalorder %s21, 1
    %p123 = por %p121, %p122
    %p124 = scmp.ne.s32.totalorder %s115, %s116
    %p125 = scmp.eq.s32.totalorder %s21, 0
    %p126 = por %p124, %p125
    %p127 = scmp.ne.s32.totalorder %s115, %s116
    %p128 = scmp.eq.s32.totalorder %s22, 1
    %p129 = por %p127, %p128
    %p131 = scmp.ne.s32.totalorder %s116, %s130
    %p132 = scmp.eq.s32.totalorder %s22, 0
    %p133 = por %p131, %p132
    %s135 = sadd.s32 %s134, 1
    %p138 = scmp.eq.s32.totalorder %s16, 1
    %p139 = scmp.ne.s32.totalorder %s134, %s136
    %p140 = scmp.eq.s32.totalorder %s16, 0
    %p141 = por %p139, %p140
    %p142 = scmp.ne.s32.totalorder %s134, %s136
    %p143 = scmp.eq.s32.totalorder %s21, 1
    %p144 = por %p142, %p143
    %p145 = scmp.ne.s32.totalorder %s136, %s137
    %p146 = scmp.eq.s32.totalorder %s21, 0
    %p147 = por %p145, %p146
    %p148 = scmp.ne.s32.totalorder %s136, %s137
    %p149 = scmp.eq.s32.totalorder %s22, 1
    %p150 = por %p148, %p149
    %p152 = scmp.ne.s32.totalorder %s137, %s151
    %p153 = scmp.eq.s32.totalorder %s22, 0
    %p154 = por %p152, %p153
    %s156 = sadd.s32 %s155, 1
    %p159 = scmp.eq.s32.totalorder %s16, 1
    %p160 = scmp.ne.s32.totalorder %s155, %s157
    %p161 = scmp.eq.s32.totalorder %s16, 0
    %p162 = por %p160, %p161
    %p163 = scmp.ne.s32.totalorder %s155, %s157
    %p164 = scmp.eq.s32.totalorder %s21, 1
    %p165 = por %p163, %p164
    %p166 = scmp.ne.s32.totalorder %s157, %s158
    %p167 = scmp.eq.s32.totalorder %s21, 0
    %p168 = por %p166, %p167
    %p169 = scmp.ne.s32.totalorder %s157, %s158
    %p170 = scmp.eq.s32.totalorder %s22, 1
    %p171 = por %p169, %p170
    %p173 = scmp.ne.s32.totalorder %s158, %s172
    %p174 = scmp.eq.s32.totalorder %s22, 0
    %p175 = por %p173, %p174
    %s177 = sadd.s32 %s176, 1
    %p180 = scmp.eq.s32.totalorder %s16, 1
    %p181 = scmp.ne.s32.totalorder %s176, %s178
    %p182 = scmp.eq.s32.totalorder %s16, 0
    %p183 = por %p181, %p182
    %p184 = scmp.ne.s32.totalorder %s176, %s178
    %p185 = scmp.eq.s32.totalorder %s21, 1
    %p186 = por %p184, %p185
    %p187 = scmp.ne.s32.totalorder %s178, %s179
    %p188 = scmp.eq.s32.totalorder %s21, 0
    %p189 = por %p187, %p188
    %p190 = scmp.ne.s32.totalorder %s178, %s179
    %p191 = scmp.eq.s32.totalorder %s22, 1
    %p192 = por %p190, %p191
    %p194 = scmp.ne.s32.totalorder %s179, %s193
    %p195 = scmp.eq.s32.totalorder %s22, 0
    %p196 = por %p194, %p195
    %s198 = sadd.s32 %s197, 1
    %p201 = scmp.eq.s32.totalorder %s16, 1
    %p202 = scmp.ne.s32.totalorder %s197, %s199
    %p203 = scmp.eq.s32.totalorder %s16, 0
    %p204 = por %p202, %p203
    %p205 = scmp.ne.s32.totalorder %s197, %s199
    %p206 = scmp.eq.s32.totalorder %s21, 1
    %p207 = por %p205, %p206
    %p208 = scmp.ne.s32.totalorder %s199, %s200
    %p209 = scmp.eq.s32.totalorder %s21, 0
    %p210 = por %p208, %p209
    %p211 = scmp.ne.s32.totalorder %s199, %s200
    %p212 = scmp.eq.s32.totalorder %s22, 1
    %p213 = por %p211, %p212
    %p215 = scmp.ne.s32.totalorder %s200, %s214
    %p216 = scmp.eq.s32.totalorder %s22, 0
    %p217 = por %p215, %p216
    %s219 = sadd.s32 %s218, 1
    %p222 = scmp.eq.s32.totalorder %s16, 1
    %p223 = scmp.ne.s32.totalorder %s218, %s220
    %p224 = scmp.eq.s32.totalorder %s16, 0
    %p225 = por %p223, %p224
    %p226 = scmp.ne.s32.totalorder %s218, %s220
    %p227 = scmp.eq.s32.totalorder %s21, 1
    %p228 = por %p226, %p227
    %p229 = scmp.ne.s32.totalorder %s220, %s221
    %p230 = scmp.eq.s32.totalorder %s21, 0
    %p231 = por %p229, %p230
    %p232 = scmp.ne.s32.totalorder %s220, %s221
    %p233 = scmp.eq.s32.totalorder %s22, 1
    %p234 = por %p232, %p233
    %p236 = scmp.ne.s32.totalorder %s221, %s235
    %p237 = scmp.eq.s32.totalorder %s22, 0
    %p238 = por %p236, %p237
    %s239 = ssub.s32 %s16, %s23
    %p240 = scmp.eq.s32.totalorder %s239, 0
    %s242 = sadd.s32 %s241, 1
    %s243 = scalar_select %p240, %s241, %s242
    %p246 = pneg %p240
    %p247 = scmp.eq.s32.totalorder %s16, 1
    %p248 = por %p246, %p247
    %p249 = scmp.ne.s32.totalorder %s241, %s244
    %p250 = scmp.eq.s32.totalorder %s16, 0
    %p251 = por %p249, %p250
    %p252 = scmp.ne.s32.totalorder %s241, %s244
    %p253 = scmp.eq.s32.totalorder %s21, 1
    %p254 = por %p252, %p253
    %p255 = scmp.ne.s32.totalorder %s244, %s245
    %p256 = scmp.eq.s32.totalorder %s21, 0
    %p257 = por %p255, %p256
    %p258 = scmp.ne.s32.totalorder %s244, %s245
    %p259 = scmp.eq.s32.totalorder %s22, 1
    %p260 = por %p258, %p259
    %p262 = scmp.ne.s32.totalorder %s245, %s261
    %p263 = scmp.eq.s32.totalorder %s22, 0
    %p264 = por %p262, %p263
    %p265 = scmp.le.s32.totalorder 1, %s16
    %p266 = scmp.lt.s32.totalorder %s16, 3
    %p267 = pnand %p265, %p266
    %p268 = pneg %p267
    // Predicated region
    $region9: #{_svfe_jit.1} parent=5 // pred_check
      _
    $region10: #{_svfe_jit.1} parent=5 // pred_check_branch
      %270 = sbr.rel (%p267) target = $region12
    $region11: #{_svfe_jit.1} parent=5 // pred_region
      %s271 = ssub.s32 %s16, 1
      // Predicated region
      $region13: #{_svfe_jit.1} parent=11 // pred_check
        %p272 = pneg %p63
      $region14: #{_svfe_jit.1} parent=11 // pred_check_branch
        %274 = sbr.rel (%p272) target = $region16
      $region15: #{_svfe_jit.1} parent=11 // pred_region
        _
      $region16: #{_svfe_jit.1} parent=11 // pred_fallthru
        _
      // Predicated region
      $region17: #{_svfe_jit.1} parent=11 // pred_check
        %p275 = pneg %p84
      $region18: #{_svfe_jit.1} parent=11 // pred_check_branch
        %277 = sbr.rel (%p275) target = $region20
      $region19: #{_svfe_jit.1} parent=11 // pred_region
        _
      $region20: #{_svfe_jit.1} parent=11 // pred_fallthru
        _
      // Predicated region
      $region21: #{_svfe_jit.1} parent=11 // pred_check
        %p278 = pneg %p105
      $region22: #{_svfe_jit.1} parent=11 // pred_check_branch
        %280 = sbr.rel (%p278) target = $region24
      $region23: #{_svfe_jit.1} parent=11 // pred_region
        _
      $region24: #{_svfe_jit.1} parent=11 // pred_fallthru
        _
      // Predicated region
      $region25: #{_svfe_jit.1} parent=11 // pred_check
        %p281 = pneg %p126
      $region26: #{_svfe_jit.1} parent=11 // pred_check_branch
        %283 = sbr.rel (%p281) target = $region28
      $region27: #{_svfe_jit.1} parent=11 // pred_region
        _
      $region28: #{_svfe_jit.1} parent=11 // pred_fallthru
        _
      // Predicated region
      $region29: #{_svfe_jit.1} parent=11 // pred_check
        %p284 = pneg %p147
      $region30: #{_svfe_jit.1} parent=11 // pred_check_branch
        %286 = sbr.rel (%p284) target = $region32
      $region31: #{_svfe_jit.1} parent=11 // pred_region
        _
      $region32: #{_svfe_jit.1} parent=11 // pred_fallthru
        _
      // Predicated region
      $region33: #{_svfe_jit.1} parent=11 // pred_check
        %p287 = pneg %p168
      $region34: #{_svfe_jit.1} parent=11 // pred_check_branch
        %289 = sbr.rel (%p287) target = $region36
      $region35: #{_svfe_jit.1} parent=11 // pred_region
        _
      $region36: #{_svfe_jit.1} parent=11 // pred_fallthru
        _
      // Predicated region
      $region37: #{_svfe_jit.1} parent=11 // pred_check
        %p290 = pneg %p189
      $region38: #{_svfe_jit.1} parent=11 // pred_check_branch
        %292 = sbr.rel (%p290) target = $region40
      $region39: #{_svfe_jit.1} parent=11 // pred_region
        _
      $region40: #{_svfe_jit.1} parent=11 // pred_fallthru
        _
      // Predicated region
      $region41: #{_svfe_jit.1} parent=11 // pred_check
        %p293 = pneg %p210
      $region42: #{_svfe_jit.1} parent=11 // pred_check_branch
        %295 = sbr.rel (%p293) target = $region44
      $region43: #{_svfe_jit.1} parent=11 // pred_region
        _
      $region44: #{_svfe_jit.1} parent=11 // pred_fallthru
        _
      // Predicated region
      $region45: #{_svfe_jit.1} parent=11 // pred_check
        %p296 = pneg %p231
      $region46: #{_svfe_jit.1} parent=11 // pred_check_branch
        %298 = sbr.rel (%p296) target = $region48
      $region47: #{_svfe_jit.1} parent=11 // pred_region
        _
      $region48: #{_svfe_jit.1} parent=11 // pred_fallthru
        _
    $region12: #{_svfe_jit.1} parent=5 // pred_fallthru
      _
    %p299 = scmp.lt.s32.totalorder %s16, 2
    // Predicated region
    $region49: #{_svfe_jit.1} parent=5 // pred_check
      %p300 = pneg %p299
    $region50: #{_svfe_jit.1} parent=5 // pred_check_branch
      %302 = sbr.rel (%p300) target = $region52
    $region51: #{_svfe_jit.1} parent=5 // pred_region
      // Predicated region
      $region53: #{_svfe_jit.1} parent=51 // pred_check
        %p303 = pneg %p36
      $region54: #{_svfe_jit.1} parent=51 // pred_check_branch
        %305 = sbr.rel (%p303) target = $region56
      $region55: #{_svfe_jit.1} parent=51 // pred_region
        %s306 = smul.u32 4, %s16
        %p307 = scmp.lt.s32.totalorder %s306, 7
        %s308 = scalar_select %p307, %s306, 7
        %s309 = smul.addr %s308, 5
        %s310 = smul.addr %s309, 8
        %s311 = scalar_lea.vmem %s0, %s310
        %s312 = smul.u32 4, %s16
      $region56: #{_svfe_jit.1} parent=51 // pred_fallthru
        _
    $region52: #{_svfe_jit.1} parent=5 // pred_fallthru
      _
    %p313 = scmp.le.s32.totalorder 1, %s16
    %p314 = scmp.lt.s32.totalorder %s16, 3
    %p315 = pnand %p313, %p314
    %p316 = pneg %p315
    // Predicated region
    $region57: #{_svfe_jit.1} parent=5 // pred_check
      _
    $region58: #{_svfe_jit.1} parent=5 // pred_check_branch
      %318 = sbr.rel (%p315) target = $region60
    $region59: #{_svfe_jit.1} parent=5 // pred_region
      %s319 = ssub.s32 %s16, 1
      %s320 = smul.u32 4, %s21
      %p321 = scmp.lt.s32.totalorder %s320, 7
      %s322 = scalar_select %p321, %s320, 7
      %s323 = smul.addr %s322, 5
      %s324 = smul.addr %s323, 8
      %s325 = scalar_lea.vmem %s0, %s324
      %p326 = pneg %p42
      %p327 = pneg %p39
      %p328 = pneg %p63
      %p329 = pneg %p60
      %p330 = pneg %p84
      %p331 = pneg %p81
      %p332 = pneg %p105
      %p333 = pneg %p102
      %p334 = pneg %p126
      %p335 = pneg %p123
      %p336 = pneg %p147
      %p337 = pneg %p144
      %p338 = pneg %p168
      %p339 = pneg %p165
      %p340 = pneg %p189
      %p341 = pneg %p186
      %p342 = pneg %p210
      %p343 = pneg %p207
      %p344 = pneg %p231
      %p345 = pneg %p228
      %p346 = pneg %p257
      %p347 = pneg %p254
      %s348 = smul.u32 4, %s21
      %p349 = scmp.lt.s32.totalorder %s348, 7
      %s350 = scalar_select %p349, %s348, 7
      %s351 = smul.addr %s350, 5
      %s352 = smul.addr %s351, 8
      %s353 = scalar_lea.vmem %s10, %s352
      %s354 = smul.u32 4, %s21
      %p355 = scmp.lt.s32.totalorder %s354, 7
      %s356 = scalar_select %p355, %s354, 7
      %s357 = smul.addr %s356, 5
      %s358 = smul.addr %s357, 8
      %s359 = scalar_lea.vmem %s0, %s358
      %s360 = smul.u32 4, %s21
      %s361 = smul.u32 4, %s21
      %p362 = scmp.lt.s32.totalorder %s361, 7
      %s363 = scalar_select %p362, %s361, 7
      %s364 = smul.addr %s363, 5
      %s365 = smul.addr %s364, 8
      %s366 = scalar_lea.vmem %s10, %s365
      %s367 = smul.u32 4, %s21
      %v368 = vld [vmem:[%s359] sm:$0xff]
      %v369 = vld [vmem:[%s359 + $0x8] sm:$0xff]
      %v370 = vld [vmem:[%s359 + $0x10] sm:$0xff]
      %v371 = vld [vmem:[%s359 + $0x18] sm:$0xff]
      %v372 = vld [vmem:[%s359 + $0x20] sm:$0xff]
      %v373 = vld [vmem:[%s359 + $0x28] sm:$0xff]
      %v374 = vld [vmem:[%s359 + $0x30] sm:$0xff]
      %v375 = vld [vmem:[%s359 + $0x38] sm:$0xff]
      %v376 = vld [vmem:[%s359 + $0x40] sm:$0xff]
      %v377 = vld [vmem:[%s359 + $0x48] sm:$0xff]
      %v378 = vld [vmem:[%s359 + $0x50] sm:$0xff]
      %v379 = vld [vmem:[%s359 + $0x58] sm:$0xff]
      %v380 = vld [vmem:[%s359 + $0x60] sm:$0xff]
      %v381 = vld [vmem:[%s359 + $0x68] sm:$0xff]
      %v382 = vld [vmem:[%s359 + $0x70] sm:$0xff]
      %v383 = vld [vmem:[%s359 + $0x78] sm:$0xff]
      %v384 = vld [vmem:[%s359 + $0x80] sm:$0xff]
      %v385 = vld [vmem:[%s359 + $0x88] sm:$0xff]
      %v386 = vld [vmem:[%s359 + $0x90] sm:$0xff]
      %v387 = vld [vmem:[%s359 + $0x98] sm:$0xff]
      %v388 = vld [vmem:[%s1] sm:$0x7f]
      %v389 = vld [vmem:[%s2] sm:$0x1]
      %v391 = vlaneseq
      %v392 = vshrl.u32 %v391, 7
      %v393 = vsub.s32 0, %v392
      %v394 = vrot.slane %v389, %v393
      %vm396 = vcmask 56320
      %v398 = vsel %vm396, %v368, 0
      %v401 = vsel %vm396, %v369, 0
      %v404 = vsel %vm396, %v370, 0
      %v407 = vsel %vm396, %v371, 0
      %v410 = vsel %vm396, %v372, 0
      %v413 = vsel %vm396, %v373, 0
      %v416 = vsel %vm396, %v374, 0
      %v419 = vsel %vm396, %v375, 0
      %v422 = vsel %vm396, %v376, 0
      %v425 = vsel %vm396, %v377, 0
      %v428 = vsel %vm396, %v378, 0
      %v431 = vsel %vm396, %v379, 0
      %v434 = vsel %vm396, %v380, 0
      %v437 = vsel %vm396, %v381, 0
      %v440 = vsel %vm396, %v382, 0
      %v443 = vsel %vm396, %v383, 0
      %v446 = vsel %vm396, %v384, 0
      %v449 = vsel %vm396, %v385, 0
      %v452 = vsel %vm396, %v386, 0
      %v455 = vsel %vm396, %v387, 0
      %vm457 = vcmask 1046528
      %v459 = vsel %vm457, %v388, 0
      %461 = vmatprep.subr.mxu0 0.0
      %462 = vmatpush1.msra.mxu0 %v459
      %463 = vmatprep.subr.mxu0 0.0
      %464 = vmatpush1.msra.mxu0 0.0
      %465 = vmatprep.subr.mxu0 0.0
      %466 = vmatpush1.msra.mxu0 0.0
      %467 = vmatprep.subr.mxu0 0.0
      %468 = vmatpush1.msra.mxu0 0.0
      %469 = vmatprep.subr.mxu0 0.0
      %470 = vmatpush1.msra.mxu0 0.0
      %471 = vmatprep.subr.mxu0 0.0
      %472 = vmatpush1.msra.mxu0 0.0
      %473 = vmatprep.subr.mxu0 0.0
      %474 = vmatpush1.msra.mxu0 0.0
      %475 = vmatprep.subr.mxu0 0.0
      %476 = vmatpush1.msra.mxu0 0.0
      %477 = vmatprep.subr.mxu0 0.0
      %478 = vmatpush1.msra.mxu0 0.0
      %479 = vmatprep.subr.mxu0 0.0
      %480 = vmatpush1.msra.mxu0 0.0
      %481 = vmatprep.subr.mxu0 0.0
      %482 = vmatpush1.msra.mxu0 0.0
      %483 = vmatprep.subr.mxu0 0.0
      %484 = vmatpush1.msra.mxu0 0.0
      %485 = vmatprep.subr.mxu0 0.0
      %486 = vmatpush1.msra.mxu0 0.0
      %487 = vmatprep.subr.mxu0 0.0
      %488 = vmatpush1.msra.mxu0 0.0
      %489 = vmatprep.subr.mxu0 0.0
      %490 = vmatpush1.msra.mxu0 0.0
      %491 = vmatprep.subr.mxu0 0.0
      %492 = vmatpush1.msra.mxu0 0.0
      %493 = vmatprep.subr.mxu0 0.0
      %494 = vmatpush1.msra.mxu0 0.0
      %495 = vmatprep.subr.mxu0 0.0
      %496 = vmatpush1.msra.mxu0 0.0
      %497 = vmatprep.subr.mxu0 0.0
      %498 = vmatpush1.msra.mxu0 0.0
      %499 = vmatprep.subr.mxu0 0.0
      %500 = vmatpush1.msra.mxu0 0.0
      %501 = vmatprep.subr.mxu0 0.0
      %502 = vmatpush1.msra.mxu0 0.0
      %503 = vmatprep.subr.mxu0 0.0
      %504 = vmatpush1.msra.mxu0 0.0
      %505 = vmatprep.subr.mxu0 0.0
      %506 = vmatpush1.msra.mxu0 0.0
      %507 = vmatprep.subr.mxu0 0.0
      %508 = vmatpush1.msra.mxu0 0.0
      %509 = vmatprep.subr.mxu0 0.0
      %510 = vmatpush1.msra.mxu0 0.0
      %511 = vmatprep.subr.mxu0 0.0
      %512 = vmatpush1.msra.mxu0 0.0
      %513 = vmatprep.subr.mxu0 0.0
      %514 = vmatpush1.msra.mxu0 0.0
      %515 = vmatprep.subr.mxu0 0.0
      %516 = vmatpush1.msra.mxu0 0.0
      %517 = vmatprep.subr.mxu0 0.0
      %518 = vmatpush1.msra.mxu0 0.0
      %519 = vmatprep.subr.mxu0 0.0
      %520 = vmatpush1.msra.mxu0 0.0
      %521 = vmatprep.subr.mxu0 0.0
      %522 = vmatpush1.msra.mxu0 0.0
      %523 = vmatprep.subr.mxu0 0.0
      %524 = vmatpush1.msra.mxu0 0.0
      %525 = vmatprep.mubr.f32.mxu0 0.0
      %526 = vmatmul.mubr.f32.gmra.mrb[0].mxu0 %v398
      %v527 = vpop.f32.mrb[0].mxu0
      %v528 = vadd.f32 %v394, %v527
      %v529 = vpop.f32.mrb[0].mxu0
      %530 = vmatprep.mubr.f32.mxu0 0.0
      %531 = vmatmul.mubr.f32.gmra.mrb[0].mxu0 %v401
      %v532 = vpop.f32.mrb[0].mxu0
      %v533 = vadd.f32 %v394, %v532
      %v534 = vpop.f32.mrb[0].mxu0
      %535 = vmatprep.mubr.f32.mxu0 0.0
      %536 = vmatmul.mubr.f32.gmra.mrb[0].mxu0 %v404
      %v537 = vpop.f32.mrb[0].mxu0
      %v538 = vadd.f32 %v394, %v537
      %v539 = vpop.f32.mrb[0].mxu0
      %540 = vmatprep.mubr.f32.mxu0 0.0
      %541 = vmatmul.mubr.f32.gmra.mrb[0].mxu0 %v407
      %v542 = vpop.f32.mrb[0].mxu0
      %v543 = vadd.f32 %v394, %v542
      %v544 = vpop.f32.mrb[0].mxu0
      %545 = vmatprep.mubr.f32.mxu0 0.0
      %546 = vmatmul.mubr.f32.gmra.mrb[0].mxu0 %v410
      %v547 = vpop.f32.mrb[0].mxu0
      %v548 = vadd.f32 %v394, %v547
      %v549 = vpop.f32.mrb[0].mxu0
      %550 = vmatprep.mubr.f32.mxu0 0.0
      %551 = vmatmul.mubr.f32.gmra.mrb[0].mxu0 %v413
      %v552 = vpop.f32.mrb[0].mxu0
      %v553 = vadd.f32 %v394, %v552
      %v554 = vpop.f32.mrb[0].mxu0
      %555 = vmatprep.mubr.f32.mxu0 0.0
      %556 = vmatmul.mubr.f32.gmra.mrb[0].mxu0 %v416
      %v557 = vpop.f32.mrb[0].mxu0
      %v558 = vadd.f32 %v394, %v557
      %v559 = vpop.f32.mrb[0].mxu0
      %560 = vmatprep.mubr.f32.mxu0 0.0
      %561 = vmatmul.mubr.f32.gmra.mrb[0].mxu0 %v419
      %v562 = vpop.f32.mrb[0].mxu0
      %v563 = vadd.f32 %v394, %v562
      %v564 = vpop.f32.mrb[0].mxu0
      %565 = vmatprep.mubr.f32.mxu0 0.0
      %566 = vmatmul.mubr.f32.gmra.mrb[0].mxu0 %v422
      %v567 = vpop.f32.mrb[0].mxu0
      %v568 = vadd.f32 %v394, %v567
      %v569 = vpop.f32.mrb[0].mxu0
      %570 = vmatprep.mubr.f32.mxu0 0.0
      %571 = vmatmul.mubr.f32.gmra.mrb[0].mxu0 %v425
      %v572 = vpop.f32.mrb[0].mxu0
      %v573 = vadd.f32 %v394, %v572
      %v574 = vpop.f32.mrb[0].mxu0
      %575 = vmatprep.mubr.f32.mxu0 0.0
      %576 = vmatmul.mubr.f32.gmra.mrb[0].mxu0 %v428
      %v577 = vpop.f32.mrb[0].mxu0
      %v578 = vadd.f32 %v394, %v577
      %v579 = vpop.f32.mrb[0].mxu0
      %580 = vmatprep.mubr.f32.mxu0 0.0
      %581 = vmatmul.mubr.f32.gmra.mrb[0].mxu0 %v431
      %v582 = vpop.f32.mrb[0].mxu0
      %v583 = vadd.f32 %v394, %v582
      %v584 = vpop.f32.mrb[0].mxu0
      %585 = vmatprep.mubr.f32.mxu0 0.0
      %586 = vmatmul.mubr.f32.gmra.mrb[0].mxu0 %v434
      %v587 = vpop.f32.mrb[0].mxu0
      %v588 = vadd.f32 %v394, %v587
      %v589 = vpop.f32.mrb[0].mxu0
      %590 = vmatprep.mubr.f32.mxu0 0.0
      %591 = vmatmul.mubr.f32.gmra.mrb[0].mxu0 %v437
      %v592 = vpop.f32.mrb[0].mxu0
      %v593 = vadd.f32 %v394, %v592
      %v594 = vpop.f32.mrb[0].mxu0
      %595 = vmatprep.mubr.f32.mxu0 0.0
      %596 = vmatmul.mubr.f32.gmra.mrb[0].mxu0 %v440
      %v597 = vpop.f32.mrb[0].mxu0
      %v598 = vadd.f32 %v394, %v597
      %v599 = vpop.f32.mrb[0].mxu0
      %600 = vmatprep.mubr.f32.mxu0 0.0
      %601 = vmatmul.mubr.f32.gmra.mrb[0].mxu0 %v443
      %v602 = vpop.f32.mrb[0].mxu0
      %v603 = vadd.f32 %v394, %v602
      %v604 = vpop.f32.mrb[0].mxu0
      %605 = vmatprep.mubr.f32.mxu0 0.0
      %606 = vmatmul.mubr.f32.gmra.mrb[0].mxu0 %v446
      %v607 = vpop.f32.mrb[0].mxu0
      %v608 = vadd.f32 %v394, %v607
      %v609 = vpop.f32.mrb[0].mxu0
      %610 = vmatprep.mubr.f32.mxu0 0.0
      %611 = vmatmul.mubr.f32.gmra.mrb[0].mxu0 %v449
      %v612 = vpop.f32.mrb[0].mxu0
      %v613 = vadd.f32 %v394, %v612
      %v614 = vpop.f32.mrb[0].mxu0
      %615 = vmatprep.mubr.f32.mxu0 0.0
      %616 = vmatmul.mubr.f32.gmra.mrb[0].mxu0 %v452
      %v617 = vpop.f32.mrb[0].mxu0
      %v618 = vadd.f32 %v394, %v617
      %v619 = vpop.f32.mrb[0].mxu0
      %620 = vmatprep.mubr.f32.mxu0 0.0
      %621 = vmatmul.mubr.f32.gmra.mrb[0].mxu0 %v455
      %v622 = vpop.f32.mrb[0].mxu0
      %v623 = vadd.f32 %v394, %v622
      %v624 = vpop.f32.mrb[0].mxu0
      %625 = vdwg.mxu0
      %v626 = vmax.f32 %v528, 0.0
      %v627 = vmax.f32 %v533, 0.0
      %v628 = vmax.f32 %v538, 0.0
      %v629 = vmax.f32 %v543, 0.0
      %v630 = vmax.f32 %v548, 0.0
      %v631 = vmax.f32 %v553, 0.0
      %v632 = vmax.f32 %v558, 0.0
      %v633 = vmax.f32 %v563, 0.0
      %v634 = vmax.f32 %v568, 0.0
      %v635 = vmax.f32 %v573, 0.0
      %v636 = vmax.f32 %v578, 0.0
      %v637 = vmax.f32 %v583, 0.0
      %v638 = vmax.f32 %v588, 0.0
      %v639 = vmax.f32 %v593, 0.0
      %v640 = vmax.f32 %v598, 0.0
      %v641 = vmax.f32 %v603, 0.0
      %v642 = vmax.f32 %v608, 0.0
      %v643 = vmax.f32 %v613, 0.0
      %v644 = vmax.f32 %v618, 0.0
      %v645 = vmax.f32 %v623, 0.0
      %v646 = vld [vmem:[%s3] sm:$0x1]
      %v648 = vlaneseq
      %v649 = vshrl.u32 %v648, 7
      %v650 = vsub.s32 0, %v649
      %v651 = vrot.slane %v646, %v650
      %v653 = vmul.f32 %v626, %v651
      %v654 = vmul.f32 %v627, %v651
      %v655 = vmul.f32 %v628, %v651
      %v656 = vmul.f32 %v629, %v651
      %v657 = vmul.f32 %v630, %v651
      %v658 = vmul.f32 %v631, %v651
      %v659 = vmul.f32 %v632, %v651
      %v660 = vmul.f32 %v633, %v651
      %v661 = vmul.f32 %v634, %v651
      %v662 = vmul.f32 %v635, %v651
      %v663 = vmul.f32 %v636, %v651
      %v664 = vmul.f32 %v637, %v651
      %v665 = vmul.f32 %v638, %v651
      %v666 = vmul.f32 %v639, %v651
      %v667 = vmul.f32 %v640, %v651
      %v668 = vmul.f32 %v641, %v651
      %v669 = vmul.f32 %v642, %v651
      %v670 = vmul.f32 %v643, %v651
      %v671 = vmul.f32 %v644, %v651
      %v672 = vmul.f32 %v645, %v651
      %v673 = vld [vmem:[%s4] sm:$0x1]
      %v675 = vlaneseq
      %v676 = vshrl.u32 %v675, 7
      %v677 = vsub.s32 0, %v676
      %v678 = vrot.slane %v673, %v677
      %v680 = vadd.f32 %v653, %v678
      %v681 = vadd.f32 %v654, %v678
      %v682 = vadd.f32 %v655, %v678
      %v683 = vadd.f32 %v656, %v678
      %v684 = vadd.f32 %v657, %v678
      %v685 = vadd.f32 %v658, %v678
      %v686 = vadd.f32 %v659, %v678
      %v687 = vadd.f32 %v660, %v678
      %v688 = vadd.f32 %v661, %v678
      %v689 = vadd.f32 %v662, %v678
      %v690 = vadd.f32 %v663, %v678
      %v691 = vadd.f32 %v664, %v678
      %v692 = vadd.f32 %v665, %v678
      %v693 = vadd.f32 %v666, %v678
      %v694 = vadd.f32 %v667, %v678
      %v695 = vadd.f32 %v668, %v678
      %v696 = vadd.f32 %v669, %v678
      %v697 = vadd.f32 %v670, %v678
      %v698 = vadd.f32 %v671, %v678
      %v699 = vadd.f32 %v672, %v678
      %vm700 = vcmask 130048
      %v701 = vsel %vm700, %v680, -inf
      %v702 = vsel %vm700, %v681, -inf
      %v703 = vmax.f32 %v701, %v702
      %v704 = vsel %vm700, %v682, -inf
      %v705 = vmax.f32 %v703, %v704
      %v706 = vsel %vm700, %v683, -inf
      %v707 = vmax.f32 %v705, %v706
      %v708 = vsel %vm700, %v684, -inf
      %v709 = vmax.f32 %v707, %v708
      %v710 = vrot.slane %v709, 4
      %v711 = vmax.f32 %v709, %v710
      %v712 = vrot.slane %v711, 2
      %v713 = vmax.f32 %v711, %v712
      %v714 = vrot.slane %v713, 1
      %v715 = vmax.f32 %v713, %v714
      %v716 = vsel %vm700, %v685, -inf
      %v717 = vsel %vm700, %v686, -inf
      %v718 = vmax.f32 %v716, %v717
      %v719 = vsel %vm700, %v687, -inf
      %v720 = vmax.f32 %v718, %v719
      %v721 = vsel %vm700, %v688, -inf
      %v722 = vmax.f32 %v720, %v721
      %v723 = vsel %vm700, %v689, -inf
      %v724 = vmax.f32 %v722, %v723
      %v725 = vrot.slane %v724, 4
      %v726 = vmax.f32 %v724, %v725
      %v727 = vrot.slane %v726, 2
      %v728 = vmax.f32 %v726, %v727
      %v729 = vrot.slane %v728, 1
      %v730 = vmax.f32 %v728, %v729
      %v731 = vsel %vm700, %v690, -inf
      %v732 = vsel %vm700, %v691, -inf
      %v733 = vmax.f32 %v731, %v732
      %v734 = vsel %vm700, %v692, -inf
      %v735 = vmax.f32 %v733, %v734
      %v736 = vsel %vm700, %v693, -inf
      %v737 = vmax.f32 %v735, %v736
      %v738 = vsel %vm700, %v694, -inf
      %v739 = vmax.f32 %v737, %v738
      %v740 = vrot.slane %v739, 4
      %v741 = vmax.f32 %v739, %v740
      %v742 = vrot.slane %v741, 2
      %v743 = vmax.f32 %v741, %v742
      %v744 = vrot.slane %v743, 1
      %v745 = vmax.f32 %v743, %v744
      %v746 = vsel %vm700, %v695, -inf
      %v747 = vsel %vm700, %v696, -inf
      %v748 = vmax.f32 %v746, %v747
      %v749 = vsel %vm700, %v697, -inf
      %v750 = vmax.f32 %v748, %v749
      %v751 = vsel %vm700, %v698, -inf
      %v752 = vmax.f32 %v750, %v751
      %v753 = vsel %vm700, %v699, -inf
      %v754 = vmax.f32 %v752, %v753
      %v755 = vrot.slane %v754, 4
      %v756 = vmax.f32 %v754, %v755
      %v757 = vrot.slane %v756, 2
      %v758 = vmax.f32 %v756, %v757
      %v759 = vrot.slane %v758, 1
      %v760 = vmax.f32 %v758, %v759
      %v761 = vld [vmem:[%s5] sm:$0xff]
      %v762 = vld [vmem:[%s5 + $0x8] sm:$0xff]
      %v764 = vsel %vm700, %v680, 0
      %v767 = vsel %vm700, %v681, 0
      %v770 = vsel %vm700, %v682, 0
      %v773 = vsel %vm700, %v683, 0
      %v776 = vsel %vm700, %v684, 0
      %v779 = vsel %vm700, %v685, 0
      %v782 = vsel %vm700, %v686, 0
      %v785 = vsel %vm700, %v687, 0
      %v788 = vsel %vm700, %v688, 0
      %v791 = vsel %vm700, %v689, 0
      %v794 = vsel %vm700, %v690, 0
      %v797 = vsel %vm700, %v691, 0
      %v800 = vsel %vm700, %v692, 0
      %v803 = vsel %vm700, %v693, 0
      %v806 = vsel %vm700, %v694, 0
      %v809 = vsel %vm700, %v695, 0
      %v812 = vsel %vm700, %v696, 0
      %v815 = vsel %vm700, %v697, 0
      %v818 = vsel %vm700, %v698, 0
      %v821 = vsel %vm700, %v699, 0
      %823 = vmatprep.subr.mxu0 0.0
      %824 = vmatpush1.msra.mxu0 %v761
      %825 = vmatprep.subr.mxu0 0.0
      %826 = vmatpush1.msra.mxu0 %v762
      %827 = vmatprep.subr.mxu0 0.0
      %828 = vmatpush1.msra.mxu0 0.0
      %829 = vmatprep.subr.mxu0 0.0
      %830 = vmatpush1.msra.mxu0 0.0
      %831 = vmatprep.subr.mxu0 0.0
      %832 = vmatpush1.msra.mxu0 0.0
      %833 = vmatprep.subr.mxu0 0.0
      %834 = vmatpush1.msra.mxu0 0.0
      %835 = vmatprep.subr.mxu0 0.0
      %836 = vmatpush1.msra.mxu0 0.0
      %837 = vmatprep.subr.mxu0 0.0
      %838 = vmatpush1.msra.mxu0 0.0
      %839 = vmatprep.subr.mxu0 0.0
      %840 = vmatpush1.msra.mxu0 0.0
      %841 = vmatprep.subr.mxu0 0.0
      %842 = vmatpush1.msra.mxu0 0.0
      %843 = vmatprep.subr.mxu0 0.0
      %844 = vmatpush1.msra.mxu0 0.0
      %845 = vmatprep.subr.mxu0 0.0
      %846 = vmatpush1.msra.mxu0 0.0
      %847 = vmatprep.subr.mxu0 0.0
      %848 = vmatpush1.msra.mxu0 0.0
      %849 = vmatprep.subr.mxu0 0.0
      %850 = vmatpush1.msra.mxu0 0.0
      %851 = vmatprep.subr.mxu0 0.0
      %852 = vmatpush1.msra.mxu0 0.0
      %853 = vmatprep.subr.mxu0 0.0
      %854 = vmatpush1.msra.mxu0 0.0
      %855 = vmatprep.subr.mxu0 0.0
      %856 = vmatpush1.msra.mxu0 0.0
      %857 = vmatprep.subr.mxu0 0.0
      %858 = vmatpush1.msra.mxu0 0.0
      %859 = vmatprep.subr.mxu0 0.0
      %860 = vmatpush1.msra.mxu0 0.0
      %861 = vmatprep.subr.mxu0 0.0
      %862 = vmatpush1.msra.mxu0 0.0
      %863 = vmatprep.subr.mxu0 0.0
      %864 = vmatpush1.msra.mxu0 0.0
      %865 = vmatprep.subr.mxu0 0.0
      %866 = vmatpush1.msra.mxu0 0.0
      %867 = vmatprep.subr.mxu0 0.0
      %868 = vmatpush1.msra.mxu0 0.0
      %869 = vmatprep.subr.mxu0 0.0
      %870 = vmatpush1.msra.mxu0 0.0
      %871 = vmatprep.subr.mxu0 0.0
      %872 = vmatpush1.msra.mxu0 0.0
      %873 = vmatprep.subr.mxu0 0.0
      %874 = vmatpush1.msra.mxu0 0.0
      %875 = vmatprep.subr.mxu0 0.0
      %876 = vmatpush1.msra.mxu0 0.0
      %877 = vmatprep.subr.mxu0 0.0
      %878 = vmatpush1.msra.mxu0 0.0
      %879 = vmatprep.subr.mxu0 0.0
      %880 = vmatpush1.msra.mxu0 0.0
      %881 = vmatprep.subr.mxu0 0.0
      %882 = vmatpush1.msra.mxu0 0.0
      %883 = vmatprep.subr.mxu0 0.0
      %884 = vmatpush1.msra.mxu0 0.0
      %885 = vmatprep.subr.mxu0 0.0
      %886 = vmatpush1.msra.mxu0 0.0
      %887 = vmatprep.mubr.f32.mxu0 0.0
      %888 = vmatmul.mubr.f32.gmra.mrb[0].mxu0 %v764
      %v889 = vpop.f32.mrb[0].mxu0
      %v890 = vadd.f32 0.0, %v889
      %v891 = vpop.f32.mrb[0].mxu0
      %892 = vmatprep.mubr.f32.mxu0 0.0
      %893 = vmatmul.mubr.f32.gmra.mrb[0].mxu0 %v767
      %v894 = vpop.f32.mrb[0].mxu0
      %v895 = vadd.f32 0.0, %v894
      %v896 = vpop.f32.mrb[0].mxu0
      %897 = vmatprep.mubr.f32.mxu0 0.0
      %898 = vmatmul.mubr.f32.gmra.mrb[0].mxu0 %v770
      %v899 = vpop.f32.mrb[0].mxu0
      %v900 = vadd.f32 0.0, %v899
      %v901 = vpop.f32.mrb[0].mxu0
      %902 = vmatprep.mubr.f32.mxu0 0.0
      %903 = vmatmul.mubr.f32.gmra.mrb[0].mxu0 %v773
      %v904 = vpop.f32.mrb[0].mxu0
      %v905 = vadd.f32 0.0, %v904
      %v906 = vpop.f32.mrb[0].mxu0
      %907 = vmatprep.mubr.f32.mxu0 0.0
      %908 = vmatmul.mubr.f32.gmra.mrb[0].mxu0 %v776
      %v909 = vpop.f32.mrb[0].mxu0
      %v910 = vadd.f32 0.0, %v909
      %v911 = vpop.f32.mrb[0].mxu0
      %912 = vmatprep.mubr.f32.mxu0 0.0
      %913 = vmatmul.mubr.f32.gmra.mrb[0].mxu0 %v779
      %v914 = vpop.f32.mrb[0].mxu0
      %v915 = vadd.f32 0.0, %v914
      %v916 = vpop.f32.mrb[0].mxu0
      %917 = vmatprep.mubr.f32.mxu0 0.0
      %918 = vmatmul.mubr.f32.gmra.mrb[0].mxu0 %v782
      %v919 = vpop.f32.mrb[0].mxu0
      %v920 = vadd.f32 0.0, %v919
      %v921 = vpop.f32.mrb[0].mxu0
      %922 = vmatprep.mubr.f32.mxu0 0.0
      %923 = vmatmul.mubr.f32.gmra.mrb[0].mxu0 %v785
      %v924 = vpop.f32.mrb[0].mxu0
      %v925 = vadd.f32 0.0, %v924
      %v926 = vpop.f32.mrb[0].mxu0
      %927 = vmatprep.mubr.f32.mxu0 0.0
      %928 = vmatmul.mubr.f32.gmra.mrb[0].mxu0 %v788
      %v929 = vpop.f32.mrb[0].mxu0
      %v930 = vadd.f32 0.0, %v929
      %v931 = vpop.f32.mrb[0].mxu0
      %932 = vmatprep.mubr.f32.mxu0 0.0
      %933 = vmatmul.mubr.f32.gmra.mrb[0].mxu0 %v791
      %v934 = vpop.f32.mrb[0].mxu0
      %v935 = vadd.f32 0.0, %v934
      %v936 = vpop.f32.mrb[0].mxu0
      %937 = vmatprep.mubr.f32.mxu0 0.0
      %938 = vmatmul.mubr.f32.gmra.mrb[0].mxu0 %v794
      %v939 = vpop.f32.mrb[0].mxu0
      %v940 = vadd.f32 0.0, %v939
      %v941 = vpop.f32.mrb[0].mxu0
      %942 = vmatprep.mubr.f32.mxu0 0.0
      %943 = vmatmul.mubr.f32.gmra.mrb[0].mxu0 %v797
      %v944 = vpop.f32.mrb[0].mxu0
      %v945 = vadd.f32 0.0, %v944
      %v946 = vpop.f32.mrb[0].mxu0
      %947 = vmatprep.mubr.f32.mxu0 0.0
      %948 = vmatmul.mubr.f32.gmra.mrb[0].mxu0 %v800
      %v949 = vpop.f32.mrb[0].mxu0
      %v950 = vadd.f32 0.0, %v949
      %v951 = vpop.f32.mrb[0].mxu0
      %952 = vmatprep.mubr.f32.mxu0 0.0
      %953 = vmatmul.mubr.f32.gmra.mrb[0].mxu0 %v803
      %v954 = vpop.f32.mrb[0].mxu0
      %v955 = vadd.f32 0.0, %v954
      %v956 = vpop.f32.mrb[0].mxu0
      %957 = vmatprep.mubr.f32.mxu0 0.0
      %958 = vmatmul.mubr.f32.gmra.mrb[0].mxu0 %v806
      %v959 = vpop.f32.mrb[0].mxu0
      %v960 = vadd.f32 0.0, %v959
      %v961 = vpop.f32.mrb[0].mxu0
      %962 = vmatprep.mubr.f32.mxu0 0.0
      %963 = vmatmul.mubr.f32.gmra.mrb[0].mxu0 %v809
      %v964 = vpop.f32.mrb[0].mxu0
      %v965 = vadd.f32 0.0, %v964
      %v966 = vpop.f32.mrb[0].mxu0
      %967 = vmatprep.mubr.f32.mxu0 0.0
      %968 = vmatmul.mubr.f32.gmra.mrb[0].mxu0 %v812
      %v969 = vpop.f32.mrb[0].mxu0
      %v970 = vadd.f32 0.0, %v969
      %v971 = vpop.f32.mrb[0].mxu0
      %972 = vmatprep.mubr.f32.mxu0 0.0
      %973 = vmatmul.mubr.f32.gmra.mrb[0].mxu0 %v815
      %v974 = vpop.f32.mrb[0].mxu0
      %v975 = vadd.f32 0.0, %v974
      %v976 = vpop.f32.mrb[0].mxu0
      %977 = vmatprep.mubr.f32.mxu0 0.0
      %978 = vmatmul.mubr.f32.gmra.mrb[0].mxu0 %v818
      %v979 = vpop.f32.mrb[0].mxu0
      %v980 = vadd.f32 0.0, %v979
      %v981 = vpop.f32.mrb[0].mxu0
      %982 = vmatprep.mubr.f32.mxu0 0.0
      %983 = vmatmul.mubr.f32.gmra.mrb[0].mxu0 %v821
      %v984 = vpop.f32.mrb[0].mxu0
      %v985 = vadd.f32 0.0, %v984
      %v986 = vpop.f32.mrb[0].mxu0
      %987 = vdwg.mxu0
      %v988 = vld [vmem:[%s6] sm:$0xff]
      %v989 = vld [vmem:[%s6 + $0x8] sm:$0xff]
      %vm994 = vcmask 1041409
      %v995 = vsel %vm994, %v730, %v715
      %vm996 = vcmask 1042434
      %v997 = vsel %vm996, %v745, %v995
      %vm998 = vcmask 1043459
      %v999 = vsel %vm998, %v760, %v997
      %v1000 = vsel %vm700, %v999, 0
      %1002 = vmatprep.subr.mxu0 0.0
      %1003 = vmatpush1.msra.mxu0 %v988
      %1004 = vmatprep.subr.mxu0 0.0
      %1005 = vmatpush1.msra.mxu0 %v989
      %1006 = vmatprep.subr.mxu0 0.0
      %1007 = vmatpush1.msra.mxu0 0.0
      %1008 = vmatprep.subr.mxu0 0.0
      %1009 = vmatpush1.msra.mxu0 0.0
      %1010 = vmatprep.subr.mxu0 0.0
      %1011 = vmatpush1.msra.mxu0 0.0
      %1012 = vmatprep.subr.mxu0 0.0
      %1013 = vmatpush1.msra.mxu0 0.0
      %1014 = vmatprep.subr.mxu0 0.0
      %1015 = vmatpush1.msra.mxu0 0.0
      %1016 = vmatprep.subr.mxu0 0.0
      %1017 = vmatpush1.msra.mxu0 0.0
      %1018 = vmatprep.subr.mxu0 0.0
      %1019 = vmatpush1.msra.mxu0 0.0
      %1020 = vmatprep.subr.mxu0 0.0
      %1021 = vmatpush1.msra.mxu0 0.0
      %1022 = vmatprep.subr.mxu0 0.0
      %1023 = vmatpush1.msra.mxu0 0.0
      %1024 = vmatprep.subr.mxu0 0.0
      %1025 = vmatpush1.msra.mxu0 0.0
      %1026 = vmatprep.subr.mxu0 0.0
      %1027 = vmatpush1.msra.mxu0 0.0
      %1028 = vmatprep.subr.mxu0 0.0
      %1029 = vmatpush1.msra.mxu0 0.0
      %1030 = vmatprep.subr.mxu0 0.0
      %1031 = vmatpush1.msra.mxu0 0.0
      %1032 = vmatprep.subr.mxu0 0.0
      %1033 = vmatpush1.msra.mxu0 0.0
      %1034 = vmatprep.subr.mxu0 0.0
      %1035 = vmatpush1.msra.mxu0 0.0
      %1036 = vmatprep.subr.mxu0 0.0
      %1037 = vmatpush1.msra.mxu0 0.0
      %1038 = vmatprep.subr.mxu0 0.0
      %1039 = vmatpush1.msra.mxu0 0.0
      %1040 = vmatprep.subr.mxu0 0.0
      %1041 = vmatpush1.msra.mxu0 0.0
      %1042 = vmatprep.subr.mxu0 0.0
      %1043 = vmatpush1.msra.mxu0 0.0
      %1044 = vmatprep.subr.mxu0 0.0
      %1045 = vmatpush1.msra.mxu0 0.0
      %1046 = vmatprep.subr.mxu0 0.0
      %1047 = vmatpush1.msra.mxu0 0.0
      %1048 = vmatprep.subr.mxu0 0.0
      %1049 = vmatpush1.msra.mxu0 0.0
      %1050 = vmatprep.subr.mxu0 0.0
      %1051 = vmatpush1.msra.mxu0 0.0
      %1052 = vmatprep.subr.mxu0 0.0
      %1053 = vmatpush1.msra.mxu0 0.0
      %1054 = vmatprep.subr.mxu0 0.0
      %1055 = vmatpush1.msra.mxu0 0.0
      %1056 = vmatprep.subr.mxu0 0.0
      %1057 = vmatpush1.msra.mxu0 0.0
      %1058 = vmatprep.subr.mxu0 0.0
      %1059 = vmatpush1.msra.mxu0 0.0
      %1060 = vmatprep.subr.mxu0 0.0
      %1061 = vmatpush1.msra.mxu0 0.0
      %1062 = vmatprep.subr.mxu0 0.0
      %1063 = vmatpush1.msra.mxu0 0.0
      %1064 = vmatprep.subr.mxu0 0.0
      %1065 = vmatpush1.msra.mxu0 0.0
      %1066 = vmatprep.mubr.f32.mxu0 0.0
      %1067 = vmatmul.mubr.f32.gmra.mrb[0].mxu0 %v1000
      %v1068 = vpop.f32.mrb[0].mxu0
      %v1069 = vadd.f32 0.0, %v1068
      %v1070 = vpop.f32.mrb[0].mxu0
      %1071 = vdwg.mxu0
      %v1074 = vunpack.c.l.s4 1966171168
      %v1075 = vunpack.c.0.s8 %v1074
      %v1076 = vlaneseq
      %v1077 = vshrl.u32 %v1076, 7
      %v1078 = vsub.s32 %v1075, %v1077
      %v1079 = vrot.slane %v1069, %v1078
      %v1080 = vcombine.high %v1079, %v1079
      %v1082 = vunpack.c.l.s4 1966171168
      %v1083 = vunpack.c.0.s8 %v1082
      %v1084 = vlaneseq
      %v1085 = vshrl.u32 %v1084, 7
      %v1086 = vsub.s32 %v1083, %v1085
      %v1087 = vrot.slane %v1079, %v1086
      %v1089 = vunpack.c.l.s4 1966171168
      %v1090 = vunpack.c.0.s8 %v1089
      %v1091 = vlaneseq
      %v1092 = vshrl.u32 %v1091, 7
      %v1093 = vsub.s32 %v1090, %v1092
      %v1094 = vrot.slane %v1080, %v1093
      %v1095 = vcombine.high %v1087, %v1087
      %v1096 = vcombine.high %v1094, %v1094
      %v1097 = vlaneseq
      %v1098 = vshrl.u32 %v1097, 7
      %v1099 = vsub.s32 0, %v1098
      %v1100 = vrot.slane %v1087, %v1099
      %v1101 = vlaneseq
      %v1102 = vshrl.u32 %v1101, 7
      %v1103 = vsub.s32 0, %v1102
      %v1104 = vrot.slane %v1094, %v1103
      %v1105 = vlaneseq
      %v1106 = vshrl.u32 %v1105, 7
      %v1107 = vsub.s32 0, %v1106
      %v1108 = vrot.slane %v1095, %v1107
      %v1109 = vlaneseq
      %v1110 = vshrl.u32 %v1109, 7
      %v1111 = vsub.s32 0, %v1110
      %v1112 = vrot.slane %v1096, %v1111
      %v1117 = vadd.f32 %v890, %v1100
      %v1118 = vadd.f32 %v895, %v1100
      %v1119 = vadd.f32 %v900, %v1100
      %v1120 = vadd.f32 %v905, %v1100
      %v1121 = vadd.f32 %v910, %v1100
      %v1122 = vadd.f32 %v915, %v1104
      %v1123 = vadd.f32 %v920, %v1104
      %v1124 = vadd.f32 %v925, %v1104
      %v1125 = vadd.f32 %v930, %v1104
      %v1126 = vadd.f32 %v935, %v1104
      %v1127 = vadd.f32 %v940, %v1108
      %v1128 = vadd.f32 %v945, %v1108
      %v1129 = vadd.f32 %v950, %v1108
      %v1130 = vadd.f32 %v955, %v1108
      %v1131 = vadd.f32 %v960, %v1108
      %v1132 = vadd.f32 %v965, %v1112
      %v1133 = vadd.f32 %v970, %v1112
      %v1134 = vadd.f32 %v975, %v1112
      %v1135 = vadd.f32 %v980, %v1112
      %v1136 = vadd.f32 %v985, %v1112
      %v1137 = vld [vmem:[%s7] sm:$0x1]
      %v1139 = vlaneseq
      %v1140 = vshrl.u32 %v1139, 7
      %v1141 = vsub.s32 0, %v1140
      %v1142 = vrot.slane %v1137, %v1141
      %v1144 = vadd.f32 %v1117, %v1142
      %v1145 = vadd.f32 %v1118, %v1142
      %v1146 = vadd.f32 %v1119, %v1142
      %v1147 = vadd.f32 %v1120, %v1142
      %v1148 = vadd.f32 %v1121, %v1142
      %v1149 = vadd.f32 %v1122, %v1142
      %v1150 = vadd.f32 %v1123, %v1142
      %v1151 = vadd.f32 %v1124, %v1142
      %v1152 = vadd.f32 %v1125, %v1142
      %v1153 = vadd.f32 %v1126, %v1142
      %v1154 = vadd.f32 %v1127, %v1142
      %v1155 = vadd.f32 %v1128, %v1142
      %v1156 = vadd.f32 %v1129, %v1142
      %v1157 = vadd.f32 %v1130, %v1142
      %v1158 = vadd.f32 %v1131, %v1142
      %v1159 = vadd.f32 %v1132, %v1142
      %v1160 = vadd.f32 %v1133, %v1142
      %v1161 = vadd.f32 %v1134, %v1142
      %v1162 = vadd.f32 %v1135, %v1142
      %v1163 = vadd.f32 %v1136, %v1142
      %v1164 = vmax.f32 %v1144, 0.0
      %v1165 = vmax.f32 %v1145, 0.0
      %v1166 = vmax.f32 %v1146, 0.0
      %v1167 = vmax.f32 %v1147, 0.0
      %v1168 = vmax.f32 %v1148, 0.0
      %v1169 = vmax.f32 %v1149, 0.0
      %v1170 = vmax.f32 %v1150, 0.0
      %v1171 = vmax.f32 %v1151, 0.0
      %v1172 = vmax.f32 %v1152, 0.0
      %v1173 = vmax.f32 %v1153, 0.0
      %v1174 = vmax.f32 %v1154, 0.0
      %v1175 = vmax.f32 %v1155, 0.0
      %v1176 = vmax.f32 %v1156, 0.0
      %v1177 = vmax.f32 %v1157, 0.0
      %v1178 = vmax.f32 %v1158, 0.0
      %v1179 = vmax.f32 %v1159, 0.0
      %v1180 = vmax.f32 %v1160, 0.0
      %v1181 = vmax.f32 %v1161, 0.0
      %v1182 = vmax.f32 %v1162, 0.0
      %v1183 = vmax.f32 %v1163, 0.0
      %v1184 = vld [vmem:[%s8] sm:$0x1]
      %v1186 = vlaneseq
      %v1187 = vshrl.u32 %v1186, 7
      %v1188 = vsub.s32 0, %v1187
      %v1189 = vrot.slane %v1184, %v1188
      %v1191 = vmul.f32 %v1164, %v1189
      %v1192 = vmul.f32 %v1165, %v1189
      %v1193 = vmul.f32 %v1166, %v1189
      %v1194 = vmul.f32 %v1167, %v1189
      %v1195 = vmul.f32 %v1168, %v1189
      %v1196 = vmul.f32 %v1169, %v1189
      %v1197 = vmul.f32 %v1170, %v1189
      %v1198 = vmul.f32 %v1171, %v1189
      %v1199 = vmul.f32 %v1172, %v1189
      %v1200 = vmul.f32 %v1173, %v1189
      %v1201 = vmul.f32 %v1174, %v1189
      %v1202 = vmul.f32 %v1175, %v1189
      %v1203 = vmul.f32 %v1176, %v1189
      %v1204 = vmul.f32 %v1177, %v1189
      %v1205 = vmul.f32 %v1178, %v1189
      %v1206 = vmul.f32 %v1179, %v1189
      %v1207 = vmul.f32 %v1180, %v1189
      %v1208 = vmul.f32 %v1181, %v1189
      %v1209 = vmul.f32 %v1182, %v1189
      %v1210 = vmul.f32 %v1183, %v1189
      %v1211 = vld [vmem:[%s9] sm:$0x1]
      %v1213 = vlaneseq
      %v1214 = vshrl.u32 %v1213, 7
      %v1215 = vsub.s32 0, %v1214
      %v1216 = vrot.slane %v1211, %v1215
      %v1218 = vadd.f32 %v1191, %v1216
      %v1219 = vadd.f32 %v1192, %v1216
      %v1220 = vadd.f32 %v1193, %v1216
      %v1221 = vadd.f32 %v1194, %v1216
      %v1222 = vadd.f32 %v1195, %v1216
      %v1223 = vadd.f32 %v1196, %v1216
      %v1224 = vadd.f32 %v1197, %v1216
      %v1225 = vadd.f32 %v1198, %v1216
      %v1226 = vadd.f32 %v1199, %v1216
      %v1227 = vadd.f32 %v1200, %v1216
      %v1228 = vadd.f32 %v1201, %v1216
      %v1229 = vadd.f32 %v1202, %v1216
      %v1230 = vadd.f32 %v1203, %v1216
      %v1231 = vadd.f32 %v1204, %v1216
      %v1232 = vadd.f32 %v1205, %v1216
      %v1233 = vadd.f32 %v1206, %v1216
      %v1234 = vadd.f32 %v1207, %v1216
      %v1235 = vadd.f32 %v1208, %v1216
      %v1236 = vadd.f32 %v1209, %v1216
      %v1237 = vadd.f32 %v1210, %v1216
      %vm1238 = vcmask 523264
      %v1239 = vsel %vm1238, %v1218, -inf
      %v1240 = vsel %vm1238, %v1219, -inf
      %v1241 = vmax.f32 %v1239, %v1240
      %v1242 = vsel %vm1238, %v1220, -inf
      %v1243 = vmax.f32 %v1241, %v1242
      %v1244 = vsel %vm1238, %v1221, -inf
      %v1245 = vmax.f32 %v1243, %v1244
      %v1246 = vsel %vm1238, %v1222, -inf
      %v1247 = vmax.f32 %v1245, %v1246
      %v1248 = vrot.slane %v1247, 4
      %v1249 = vmax.f32 %v1247, %v1248
      %v1250 = vrot.slane %v1249, 2
      %v1251 = vmax.f32 %v1249, %v1250
      %v1252 = vrot.slane %v1251, 1
      %v1253 = vmax.f32 %v1251, %v1252
      %v1254 = vsel %vm1238, %v1223, -inf
      %v1255 = vsel %vm1238, %v1224, -inf
      %v1256 = vmax.f32 %v1254, %v1255
      %v1257 = vsel %vm1238, %v1225, -inf
      %v1258 = vmax.f32 %v1256, %v1257
      %v1259 = vsel %vm1238, %v1226, -inf
      %v1260 = vmax.f32 %v1258, %v1259
      %v1261 = vsel %vm1238, %v1227, -inf
      %v1262 = vmax.f32 %v1260, %v1261
      %v1263 = vrot.slane %v1262, 4
      %v1264 = vmax.f32 %v1262, %v1263
      %v1265 = vrot.slane %v1264, 2
      %v1266 = vmax.f32 %v1264, %v1265
      %v1267 = vrot.slane %v1266, 1
      %v1268 = vmax.f32 %v1266, %v1267
      %v1269 = vsel %vm1238, %v1228, -inf
      %v1270 = vsel %vm1238, %v1229, -inf
      %v1271 = vmax.f32 %v1269, %v1270
      %v1272 = vsel %vm1238, %v1230, -inf
      %v1273 = vmax.f32 %v1271, %v1272
      %v1274 = vsel %vm1238, %v1231, -inf
      %v1275 = vmax.f32 %v1273, %v1274
      %v1276 = vsel %vm1238, %v1232, -inf
      %v1277 = vmax.f32 %v1275, %v1276
      %v1278 = vrot.slane %v1277, 4
      %v1279 = vmax.f32 %v1277, %v1278
      %v1280 = vrot.slane %v1279, 2
      %v1281 = vmax.f32 %v1279, %v1280
      %v1282 = vrot.slane %v1281, 1
      %v1283 = vmax.f32 %v1281, %v1282
      %v1284 = vsel %vm1238, %v1233, -inf
      %v1285 = vsel %vm1238, %v1234, -inf
      %v1286 = vmax.f32 %v1284, %v1285
      %v1287 = vsel %vm1238, %v1235, -inf
      %v1288 = vmax.f32 %v1286, %v1287
      %v1289 = vsel %vm1238, %v1236, -inf
      %v1290 = vmax.f32 %v1288, %v1289
      %v1291 = vsel %vm1238, %v1237, -inf
      %v1292 = vmax.f32 %v1290, %v1291
      %v1293 = vrot.slane %v1292, 4
      %v1294 = vmax.f32 %v1292, %v1293
      %v1295 = vrot.slane %v1294, 2
      %v1296 = vmax.f32 %v1294, %v1295
      %v1297 = vrot.slane %v1296, 1
      %v1298 = vmax.f32 %v1296, %v1297
      %1303 = vrot.lane.b32.xlu0 %v1253, 64
      %v1304 = vpop.permute.xlu0 %1303
      %1305 = vrot.lane.b32.xlu0 %v1268, 64
      %v1306 = vpop.permute.xlu0 %1305
      %1307 = vrot.lane.b32.xlu0 %v1283, 64
      %v1308 = vpop.permute.xlu0 %1307
      %1309 = vrot.lane.b32.xlu0 %v1298, 64
      %v1310 = vpop.permute.xlu0 %1309
      %v1315 = vsel %vm1238, %v1218, %v1304
      %v1316 = vsel %vm1238, %v1219, %v1304
      %v1317 = vsel %vm1238, %v1220, %v1304
      %v1318 = vsel %vm1238, %v1221, %v1304
      %v1319 = vsel %vm1238, %v1222, %v1304
      %v1320 = vsel %vm1238, %v1223, %v1306
      %v1321 = vsel %vm1238, %v1224, %v1306
      %v1322 = vsel %vm1238, %v1225, %v1306
      %v1323 = vsel %vm1238, %v1226, %v1306
      %v1324 = vsel %vm1238, %v1227, %v1306
      %v1325 = vsel %vm1238, %v1228, %v1308
      %v1326 = vsel %vm1238, %v1229, %v1308
      %v1327 = vsel %vm1238, %v1230, %v1308
      %v1328 = vsel %vm1238, %v1231, %v1308
      %v1329 = vsel %vm1238, %v1232, %v1308
      %v1330 = vsel %vm1238, %v1233, %v1310
      %v1331 = vsel %vm1238, %v1234, %v1310
      %v1332 = vsel %vm1238, %v1235, %v1310
      %v1333 = vsel %vm1238, %v1236, %v1310
      %v1334 = vsel %vm1238, %v1237, %v1310
      %1335 = vst [vmem:[%s366] sm:$0xff] %v1315
      %1336 = vst [vmem:[%s366 + $0x8] sm:$0xff] %v1316
      %1337 = vst [vmem:[%s366 + $0x10] sm:$0xff] %v1317
      %1338 = vst [vmem:[%s366 + $0x18] sm:$0xff] %v1318
      %1339 = vst [vmem:[%s366 + $0x20] sm:$0x7] %v1319
      %1340 = vst [vmem:[%s366 + $0x28] sm:$0xff] %v1320
      %1341 = vst [vmem:[%s366 + $0x30] sm:$0xff] %v1321
      %1342 = vst [vmem:[%s366 + $0x38] sm:$0xff] %v1322
      %1343 = vst [vmem:[%s366 + $0x40] sm:$0xff] %v1323
      %1344 = vst [vmem:[%s366 + $0x48] sm:$0x7] %v1324
      %1345 = vst [vmem:[%s366 + $0x50] sm:$0xff] %v1325
      %1346 = vst [vmem:[%s366 + $0x58] sm:$0xff] %v1326
      %1347 = vst [vmem:[%s366 + $0x60] sm:$0xff] %v1327
      %1348 = vst [vmem:[%s366 + $0x68] sm:$0xff] %v1328
      %1349 = vst [vmem:[%s366 + $0x70] sm:$0x7] %v1329
      %1350 = vst [vmem:[%s366 + $0x78] sm:$0xff] %v1330
      %1351 = vst [vmem:[%s366 + $0x80] sm:$0xff] %v1331
      %1352 = vst [vmem:[%s366 + $0x88] sm:$0xff] %v1332
      %1353 = vst [vmem:[%s366 + $0x90] sm:$0xff] %v1333
      %1354 = vst [vmem:[%s366 + $0x98] sm:$0x7] %v1334
      %s1355 = smul.u32 4, %s21
      %p1356 = scmp.lt.s32.totalorder %s1355, 7
      %s1357 = scalar_select %p1356, %s1355, 7
      %s1358 = smul.addr %s1357, 5
      %s1359 = smul.addr %s1358, 8
      %s1360 = scalar_lea.vmem %s10, %s1359
      // Predicated region
      $region61: #{_svfe_jit.1} parent=59 // pred_check
        %p1361 = pneg %p254
      $region62: #{_svfe_jit.1} parent=59 // pred_check_branch
        %1363 = sbr.rel (%p1361) target = $region64
      $region63: #{_svfe_jit.1} parent=59 // pred_region
        %s1364 = smul.u32 4, %s21
      $region64: #{_svfe_jit.1} parent=59 // pred_fallthru
        _
    $region60: #{_svfe_jit.1} parent=5 // pred_fallthru
      _
    %p1365 = scmp.le.s32.totalorder 2, %s16
    // Predicated region
    $region65: #{_svfe_jit.1} parent=5 // pred_check
      %p1366 = pneg %p1365
    $region66: #{_svfe_jit.1} parent=5 // pred_check_branch
      %1368 = sbr.rel (%p1366) target = $region68
    $region67: #{_svfe_jit.1} parent=5 // pred_region
      %s1369 = ssub.s32 %s16, 2
      // Predicated region
      $region69: #{_svfe_jit.1} parent=67 // pred_check
        %p1370 = pneg %p260
      $region70: #{_svfe_jit.1} parent=67 // pred_check_branch
        %1372 = sbr.rel (%p1370) target = $region72
      $region71: #{_svfe_jit.1} parent=67 // pred_region
        %s1373 = smul.u32 4, %s22
        %p1374 = scmp.lt.s32.totalorder %s1373, 7
        %s1375 = scalar_select %p1374, %s1373, 7
        %s1376 = smul.addr %s1375, 5
        %s1377 = smul.addr %s1376, 8
        %s1378 = scalar_lea.vmem %s10, %s1377
      $region72: #{_svfe_jit.1} parent=67 // pred_fallthru
        _
    $region68: #{_svfe_jit.1} parent=5 // pred_fallthru
      _
  $region6: #{_svfe_jit.1} parent=0 // loop_footer
    %s20 = sadd.s32 1, %s16
  $region7: #{_svfe_jit.1} parent=0 // loop_footer_branch
    %15 = sbr.rel target = $region3
  $region8: #{_svfe_jit.1} parent=0 // loop_exit
    _

</llo_original>
